<compile_context>
chip_gen: v6e
topology: v6e:2x2x1
jax: 0.10.0
libtpu: 0.0.40
codegen_flags: <defaults>
</compile_context>

<pallas_src>
import jax
import jax.numpy as jnp
from jax.experimental import pallas as pl
from jax.experimental.pallas import tpu as pltpu


def rnn_kernel(x_ref, h0_ref, wx_ref, bx_ref,
               w1ah_ref, w1b_ref, w2ah_ref, w2b_ref,
               out_ref, xw1_scr):
    """RNN recurrence.  Per PyTorch semantics, at step i:
        combined = concat([x_i, h], -1)
        h        = relu( MLP_lin1(combined) )   # Linear+bias -> ReLU -> Linear(no bias)
        output   = MLP_lin2(combined)           # Linear+bias -> ReLU -> Linear(no bias)
    Only the last step's `output` is returned, so the lin2 path is computed
    once after the loop and the final (never consumed) h update is skipped.
    """
    seq_len = x_ref.shape[0]
    hidden = h0_ref.shape[-1]

    # --- Off-critical-path precompute --------------------------------------
    # Fused x-projection for lin1 AND lin2: one MXU push with 2*hidden active
    # columns, biases folded in.  Kept in f32 (not on the serial chain).
    xw = jnp.dot(x_ref[...], wx_ref[...],
                 preferred_element_type=jnp.float32) + bx_ref[...]   # (seq, 2*hidden)

    # Park the per-step lin1 rows in VMEM so the loop reads row i with a cheap
    # static vld instead of an XLU sublane extraction on the dependent chain.
    xw1_scr[...] = xw[:, :hidden]
    # lin2 x-term is only needed for the last step; compute it once, off-chain.
    xw2_last = xw[seq_len - 1:seq_len, hidden:]                      # (1, hidden)

    # Loop / epilogue weights: load + cast to bf16 ONCE, above the recurrence
    # (the scheduler hides these under the latency-bound loop).
    w1ah = w1ah_ref[...].astype(jnp.bfloat16)
    w1b = w1b_ref[...].astype(jnp.bfloat16)
    w2ah = w2ah_ref[...].astype(jnp.bfloat16)
    w2b = w2b_ref[...].astype(jnp.bfloat16)

    # Hidden state carried in vregs ((1, hidden) is a fraction of one vreg).
    h = h0_ref[...]                                                  # (1, hidden) f32

    # --- Serial recurrence (fully unrolled; last h update skipped) ----------
    for i in range(seq_len - 1):
        z1 = jnp.maximum(
            xw1_scr[i:i + 1, :]
            + jnp.dot(h.astype(jnp.bfloat16), w1ah,
                      preferred_element_type=jnp.float32),
            0.0)
        h = jnp.maximum(
            jnp.dot(z1.astype(jnp.bfloat16), w1b,
                    preferred_element_type=jnp.float32),
            0.0)                                                     # RNN's self.act

    # --- Hoisted lin2/output path (last step only) ---------------------------
    z2 = jnp.maximum(
        xw2_last
        + jnp.dot(h.astype(jnp.bfloat16), w2ah,
                  preferred_element_type=jnp.float32),
        0.0)
    out_ref[...] = jnp.dot(z2.astype(jnp.bfloat16), w2b,
                           preferred_element_type=jnp.float32)


def rnn_forward(x, h0, params):
    seq_len, indim = x.shape
    hidden_dim = h0.shape[-1]
    outdim = params["w2b"].shape[-1]

    # Fuse the two x-projections (lin1 / lin2 first layers) into one weight
    # slab so the kernel does a single batched precompute matmul.
    wx = jnp.concatenate([params["w1a_x"], params["w2a_x"]], axis=1)  # (indim, 2*hidden)
    bx = jnp.concatenate([params["b1a"], params["b2a"]], axis=1)      # (1, 2*hidden)

    vmem = pl.BlockSpec(memory_space=pltpu.MemorySpace.VMEM)
    return pl.pallas_call(
        rnn_kernel,
        out_shape=jax.ShapeDtypeStruct((1, outdim), jnp.float32),
        in_specs=[vmem] * 8,
        out_specs=vmem,
        scratch_shapes=[pltpu.VMEM((seq_len, hidden_dim), jnp.float32)],
        # ~20 KB total footprint today; limit kept conservative so it still
        # fits v7x's 64 MiB physical VMEM if hidden/seq ever scale up.
        compiler_params=pltpu.CompilerParams(vmem_limit_bytes=32 * 1024 * 1024),
    )(x, h0, wx, bx,
      params["w1a_h"], params["w1b"], params["w2a_h"], params["w2b"])


# ----------------------- parameter construction -------------------------

def xavier_uniform(key, fan_in, fan_out, gain=1.0):
    # weight returned as (fan_in, fan_out)  (already transposed for y = x @ W)
    bound = gain * (6.0 / (fan_in + fan_out)) ** 0.5
    return jax.random.uniform(key, (fan_in, fan_out), jnp.float32, -bound, bound)


def make_params(key, indim, hidden_dim, outdim):
    """MLP dims (n_hidden=1): lin1 = [indim+hidden, hidden, hidden],
    lin2 = [indim+hidden, hidden, outdim]. Last layer of each MLP: bias None,
    xavier gain sqrt(3); others gain 1.0, bias zero (PyTorch init path)."""
    comb = indim + hidden_dim
    k1, k2, k3, k4 = jax.random.split(key, 4)
    gain_last = 3.0 ** 0.5

    w1a = xavier_uniform(k1, comb, hidden_dim, 1.0)              # lin1 layer0
    w1b = xavier_uniform(k2, hidden_dim, hidden_dim, gain_last)  # lin1 last (no bias)
    w2a = xavier_uniform(k3, comb, hidden_dim, 1.0)              # lin2 layer0
    w2b = xavier_uniform(k4, hidden_dim, outdim, gain_last)      # lin2 last (no bias)

    return dict(
        w1a_x=w1a[:indim], w1a_h=w1a[indim:],
        b1a=jnp.zeros((1, hidden_dim), jnp.float32), w1b=w1b,
        w2a_x=w2a[:indim], w2a_h=w2a[indim:],
        b2a=jnp.zeros((1, hidden_dim), jnp.float32), w2b=w2b,
    )


def init_hidden(key, hidden_dim):
    # RNN.init_hidden('xavier_uniform') on an empty (1, hidden_dim) tensor
    bound = (6.0 / (1 + hidden_dim)) ** 0.5
    return jax.random.uniform(key, (1, hidden_dim), jnp.float32, -bound, bound)


# ----------------------------- reference --------------------------------

def rnn_reference(x, h0, p):
    """Pure-f32 step-by-step reference matching the PyTorch forward."""
    h = h0
    out = None
    for i in range(x.shape[0]):
        x_i = x[i:i + 1, :]
        z1 = jnp.maximum(x_i @ p["w1a_x"] + h @ p["w1a_h"] + p["b1a"], 0.0)
        lin1_out = z1 @ p["w1b"]
        z2 = jnp.maximum(x_i @ p["w2a_x"] + h @ p["w2a_h"] + p["b2a"], 0.0)
        out = z2 @ p["w2b"]
        h = jnp.maximum(lin1_out, 0.0)
    return out


if __name__ == "__main__":
    seq_len, indim, hidden_dim, outdim = 8, 16, 32, 16

    key = jax.random.PRNGKey(0)
    kx, kh, kp = jax.random.split(key, 3)

    x = jax.random.normal(kx, (seq_len, indim), jnp.float32)
    h0 = init_hidden(kh, hidden_dim)
    params = make_params(kp, indim, hidden_dim, outdim)

    out = rnn_forward(x, h0, params)
    out = jax.block_until_ready(out)

    ref = rnn_reference(x, h0, params)
    assert out.shape == (1, outdim)
    # Tolerances relaxed vs the f32 reference because the serial-chain matmuls
    # feed bf16 operands to the MXU (f32 accumulation) per the perf review.
    assert jnp.allclose(out, ref, atol=5e-2, rtol=5e-2), "mismatch vs JAX reference"

    print("KERNEL_OK")
</pallas_src>

<mosaic_0001>
module attributes {stable_mosaic.version = 11 : i64} {
  func.func @rnn_kernel(%arg0: memref<8x16xf32, #tpu.memory_space<vmem>>, %arg1: memref<1x32xf32, #tpu.memory_space<vmem>>, %arg2: memref<16x64xf32, #tpu.memory_space<vmem>>, %arg3: memref<1x64xf32, #tpu.memory_space<vmem>>, %arg4: memref<32x32xf32, #tpu.memory_space<vmem>>, %arg5: memref<32x32xf32, #tpu.memory_space<vmem>>, %arg6: memref<32x32xf32, #tpu.memory_space<vmem>>, %arg7: memref<32x16xf32, #tpu.memory_space<vmem>>, %arg8: memref<1x16xf32, #tpu.memory_space<vmem>>, %arg9: memref<8x32xf32, #tpu.memory_space<vmem>>) attributes {dimension_semantics = [], scalar_prefetch = 0 : i64, scratch_operands = 1 : i64, tpu.core_type = #tpu.core_type<tc>} {
    %c0 = arith.constant 0 : index
    %c0_0 = arith.constant 0 : index
    %0 = vector.load %arg0[%c0, %c0_0] : memref<8x16xf32, #tpu.memory_space<vmem>>, vector<8x16xf32>
    %c0_1 = arith.constant 0 : index
    %c0_2 = arith.constant 0 : index
    %1 = vector.load %arg2[%c0_1, %c0_2] : memref<16x64xf32, #tpu.memory_space<vmem>>, vector<16x64xf32>
    %cst = arith.constant dense<0.000000e+00> : vector<8x64xf32>
    %2 = tpu.matmul %0, %1, %cst {dimension_numbers = #tpu.dot_dimension_numbers<[1], [0], [0], [1], [0, 0, 1, 1], [], []>} : vector<8x16xf32>, vector<16x64xf32>, vector<8x64xf32> -> vector<8x64xf32>
    %c0_3 = arith.constant 0 : index
    %c0_4 = arith.constant 0 : index
    %3 = vector.load %arg3[%c0_3, %c0_4] : memref<1x64xf32, #tpu.memory_space<vmem>>, vector<1x64xf32>
    %4 = vector.broadcast %3 : vector<1x64xf32> to vector<8x64xf32>
    %5 = arith.addf %2, %4 : vector<8x64xf32>
    %6 = vector.extract_strided_slice %5 {offsets = [0, 0], sizes = [8, 32], strides = [1, 1]} : vector<8x64xf32> to vector<8x32xf32>
    %c0_5 = arith.constant 0 : index
    %c0_6 = arith.constant 0 : index
    %7 = vector.load %arg9[%c0_5, %c0_6] : memref<8x32xf32, #tpu.memory_space<vmem>>, vector<8x32xf32>
    tpu.vector_store %arg9[%c0_5, %c0_6], %6 {strides = array<i32>} : memref<8x32xf32, #tpu.memory_space<vmem>>, vector<8x32xf32>,
    %8 = vector.extract_strided_slice %5 {offsets = [7, 32], sizes = [1, 32], strides = [1, 1]} : vector<8x64xf32> to vector<1x32xf32>
    %c0_7 = arith.constant 0 : index
    %c0_8 = arith.constant 0 : index
    %9 = vector.load %arg4[%c0_7, %c0_8] : memref<32x32xf32, #tpu.memory_space<vmem>>, vector<32x32xf32>
    %10 = arith.truncf %9 : vector<32x32xf32> to vector<32x32xbf16>
    %c0_9 = arith.constant 0 : index
    %c0_10 = arith.constant 0 : index
    %11 = vector.load %arg5[%c0_9, %c0_10] : memref<32x32xf32, #tpu.memory_space<vmem>>, vector<32x32xf32>
    %12 = arith.truncf %11 : vector<32x32xf32> to vector<32x32xbf16>
    %c0_11 = arith.constant 0 : index
    %c0_12 = arith.constant 0 : index
    %13 = vector.load %arg6[%c0_11, %c0_12] : memref<32x32xf32, #tpu.memory_space<vmem>>, vector<32x32xf32>
    %14 = arith.truncf %13 : vector<32x32xf32> to vector<32x32xbf16>
    %c0_13 = arith.constant 0 : index
    %c0_14 = arith.constant 0 : index
    %15 = vector.load %arg7[%c0_13, %c0_14] : memref<32x16xf32, #tpu.memory_space<vmem>>, vector<32x16xf32>
    %16 = arith.truncf %15 : vector<32x16xf32> to vector<32x16xbf16>
    %c0_15 = arith.constant 0 : index
    %c0_16 = arith.constant 0 : index
    %17 = vector.load %arg1[%c0_15, %c0_16] : memref<1x32xf32, #tpu.memory_space<vmem>>, vector<1x32xf32>
    %c0_17 = arith.constant 0 : index
    %c0_18 = arith.constant 0 : index
    %18 = vector.load %arg9[%c0_17, %c0_18] : memref<8x32xf32, #tpu.memory_space<vmem>>, vector<1x32xf32>
    %19 = arith.truncf %17 : vector<1x32xf32> to vector<1x32xbf16>
    %cst_19 = arith.constant dense<0.000000e+00> : vector<1x32xf32>
    %20 = tpu.matmul %19, %10, %cst_19 {dimension_numbers = #tpu.dot_dimension_numbers<[1], [0], [0], [1], [0, 0, 1, 1], [], []>} : vector<1x32xbf16>, vector<32x32xbf16>, vector<1x32xf32> -> vector<1x32xf32>
    %21 = arith.addf %18, %20 : vector<1x32xf32>
    %cst_20 = arith.constant 0.000000e+00 : f32
    %22 = vector.broadcast %cst_20 : f32 to vector<1x32xf32>
    %23 = arith.maximumf %21, %22 : vector<1x32xf32>
    %24 = arith.truncf %23 : vector<1x32xf32> to vector<1x32xbf16>
    %cst_21 = arith.constant dense<0.000000e+00> : vector<1x32xf32>
    %25 = tpu.matmul %24, %12, %cst_21 {dimension_numbers = #tpu.dot_dimension_numbers<[1], [0], [0], [1], [0, 0, 1, 1], [], []>} : vector<1x32xbf16>, vector<32x32xbf16>, vector<1x32xf32> -> vector<1x32xf32>
    %cst_22 = arith.constant 0.000000e+00 : f32
    %26 = vector.broadcast %cst_22 : f32 to vector<1x32xf32>
    %27 = arith.maximumf %25, %26 : vector<1x32xf32>
    %c1 = arith.constant 1 : index
    %c0_23 = arith.constant 0 : index
    %28 = vector.load %arg9[%c1, %c0_23] : memref<8x32xf32, #tpu.memory_space<vmem>>, vector<1x32xf32>
    %29 = arith.truncf %27 : vector<1x32xf32> to vector<1x32xbf16>
    %cst_24 = arith.constant dense<0.000000e+00> : vector<1x32xf32>
    %30 = tpu.matmul %29, %10, %cst_24 {dimension_numbers = #tpu.dot_dimension_numbers<[1], [0], [0], [1], [0, 0, 1, 1], [], []>} : vector<1x32xbf16>, vector<32x32xbf16>, vector<1x32xf32> -> vector<1x32xf32>
    %31 = arith.addf %28, %30 : vector<1x32xf32>
    %cst_25 = arith.constant 0.000000e+00 : f32
    %32 = vector.broadcast %cst_25 : f32 to vector<1x32xf32>
    %33 = arith.maximumf %31, %32 : vector<1x32xf32>
    %34 = arith.truncf %33 : vector<1x32xf32> to vector<1x32xbf16>
    %cst_26 = arith.constant dense<0.000000e+00> : vector<1x32xf32>
    %35 = tpu.matmul %34, %12, %cst_26 {dimension_numbers = #tpu.dot_dimension_numbers<[1], [0], [0], [1], [0, 0, 1, 1], [], []>} : vector<1x32xbf16>, vector<32x32xbf16>, vector<1x32xf32> -> vector<1x32xf32>
    %cst_27 = arith.constant 0.000000e+00 : f32
    %36 = vector.broadcast %cst_27 : f32 to vector<1x32xf32>
    %37 = arith.maximumf %35, %36 : vector<1x32xf32>
    %c2 = arith.constant 2 : index
    %c0_28 = arith.constant 0 : index
    %38 = vector.load %arg9[%c2, %c0_28] : memref<8x32xf32, #tpu.memory_space<vmem>>, vector<1x32xf32>
    %39 = arith.truncf %37 : vector<1x32xf32> to vector<1x32xbf16>
    %cst_29 = arith.constant dense<0.000000e+00> : vector<1x32xf32>
    %40 = tpu.matmul %39, %10, %cst_29 {dimension_numbers = #tpu.dot_dimension_numbers<[1], [0], [0], [1], [0, 0, 1, 1], [], []>} : vector<1x32xbf16>, vector<32x32xbf16>, vector<1x32xf32> -> vector<1x32xf32>
    %41 = arith.addf %38, %40 : vector<1x32xf32>
    %cst_30 = arith.constant 0.000000e+00 : f32
    %42 = vector.broadcast %cst_30 : f32 to vector<1x32xf32>
    %43 = arith.maximumf %41, %42 : vector<1x32xf32>
    %44 = arith.truncf %43 : vector<1x32xf32> to vector<1x32xbf16>
    %cst_31 = arith.constant dense<0.000000e+00> : vector<1x32xf32>
    %45 = tpu.matmul %44, %12, %cst_31 {dimension_numbers = #tpu.dot_dimension_numbers<[1], [0], [0], [1], [0, 0, 1, 1], [], []>} : vector<1x32xbf16>, vector<32x32xbf16>, vector<1x32xf32> -> vector<1x32xf32>
    %cst_32 = arith.constant 0.000000e+00 : f32
    %46 = vector.broadcast %cst_32 : f32 to vector<1x32xf32>
    %47 = arith.maximumf %45, %46 : vector<1x32xf32>
    %c3 = arith.constant 3 : index
    %c0_33 = arith.constant 0 : index
    %48 = vector.load %arg9[%c3, %c0_33] : memref<8x32xf32, #tpu.memory_space<vmem>>, vector<1x32xf32>
    %49 = arith.truncf %47 : vector<1x32xf32> to vector<1x32xbf16>
    %cst_34 = arith.constant dense<0.000000e+00> : vector<1x32xf32>
    %50 = tpu.matmul %49, %10, %cst_34 {dimension_numbers = #tpu.dot_dimension_numbers<[1], [0], [0], [1], [0, 0, 1, 1], [], []>} : vector<1x32xbf16>, vector<32x32xbf16>, vector<1x32xf32> -> vector<1x32xf32>
    %51 = arith.addf %48, %50 : vector<1x32xf32>
    %cst_35 = arith.constant 0.000000e+00 : f32
    %52 = vector.broadcast %cst_35 : f32 to vector<1x32xf32>
    %53 = arith.maximumf %51, %52 : vector<1x32xf32>
    %54 = arith.truncf %53 : vector<1x32xf32> to vector<1x32xbf16>
    %cst_36 = arith.constant dense<0.000000e+00> : vector<1x32xf32>
    %55 = tpu.matmul %54, %12, %cst_36 {dimension_numbers = #tpu.dot_dimension_numbers<[1], [0], [0], [1], [0, 0, 1, 1], [], []>} : vector<1x32xbf16>, vector<32x32xbf16>, vector<1x32xf32> -> vector<1x32xf32>
    %cst_37 = arith.constant 0.000000e+00 : f32
    %56 = vector.broadcast %cst_37 : f32 to vector<1x32xf32>
    %57 = arith.maximumf %55, %56 : vector<1x32xf32>
    %c4 = arith.constant 4 : index
    %c0_38 = arith.constant 0 : index
    %58 = vector.load %arg9[%c4, %c0_38] : memref<8x32xf32, #tpu.memory_space<vmem>>, vector<1x32xf32>
    %59 = arith.truncf %57 : vector<1x32xf32> to vector<1x32xbf16>
    %cst_39 = arith.constant dense<0.000000e+00> : vector<1x32xf32>
    %60 = tpu.matmul %59, %10, %cst_39 {dimension_numbers = #tpu.dot_dimension_numbers<[1], [0], [0], [1], [0, 0, 1, 1], [], []>} : vector<1x32xbf16>, vector<32x32xbf16>, vector<1x32xf32> -> vector<1x32xf32>
    %61 = arith.addf %58, %60 : vector<1x32xf32>
    %cst_40 = arith.constant 0.000000e+00 : f32
    %62 = vector.broadcast %cst_40 : f32 to vector<1x32xf32>
    %63 = arith.maximumf %61, %62 : vector<1x32xf32>
    %64 = arith.truncf %63 : vector<1x32xf32> to vector<1x32xbf16>
    %cst_41 = arith.constant dense<0.000000e+00> : vector<1x32xf32>
    %65 = tpu.matmul %64, %12, %cst_41 {dimension_numbers = #tpu.dot_dimension_numbers<[1], [0], [0], [1], [0, 0, 1, 1], [], []>} : vector<1x32xbf16>, vector<32x32xbf16>, vector<1x32xf32> -> vector<1x32xf32>
    %cst_42 = arith.constant 0.000000e+00 : f32
    %66 = vector.broadcast %cst_42 : f32 to vector<1x32xf32>
    %67 = arith.maximumf %65, %66 : vector<1x32xf32>
    %c5 = arith.constant 5 : index
    %c0_43 = arith.constant 0 : index
    %68 = vector.load %arg9[%c5, %c0_43] : memref<8x32xf32, #tpu.memory_space<vmem>>, vector<1x32xf32>
    %69 = arith.truncf %67 : vector<1x32xf32> to vector<1x32xbf16>
    %cst_44 = arith.constant dense<0.000000e+00> : vector<1x32xf32>
    %70 = tpu.matmul %69, %10, %cst_44 {dimension_numbers = #tpu.dot_dimension_numbers<[1], [0], [0], [1], [0, 0, 1, 1], [], []>} : vector<1x32xbf16>, vector<32x32xbf16>, vector<1x32xf32> -> vector<1x32xf32>
    %71 = arith.addf %68, %70 : vector<1x32xf32>
    %cst_45 = arith.constant 0.000000e+00 : f32
    %72 = vector.broadcast %cst_45 : f32 to vector<1x32xf32>
    %73 = arith.maximumf %71, %72 : vector<1x32xf32>
    %74 = arith.truncf %73 : vector<1x32xf32> to vector<1x32xbf16>
    %cst_46 = arith.constant dense<0.000000e+00> : vector<1x32xf32>
    %75 = tpu.matmul %74, %12, %cst_46 {dimension_numbers = #tpu.dot_dimension_numbers<[1], [0], [0], [1], [0, 0, 1, 1], [], []>} : vector<1x32xbf16>, vector<32x32xbf16>, vector<1x32xf32> -> vector<1x32xf32>
    %cst_47 = arith.constant 0.000000e+00 : f32
    %76 = vector.broadcast %cst_47 : f32 to vector<1x32xf32>
    %77 = arith.maximumf %75, %76 : vector<1x32xf32>
    %c6 = arith.constant 6 : index
    %c0_48 = arith.constant 0 : index
    %78 = vector.load %arg9[%c6, %c0_48] : memref<8x32xf32, #tpu.memory_space<vmem>>, vector<1x32xf32>
    %79 = arith.truncf %77 : vector<1x32xf32> to vector<1x32xbf16>
    %cst_49 = arith.constant dense<0.000000e+00> : vector<1x32xf32>
    %80 = tpu.matmul %79, %10, %cst_49 {dimension_numbers = #tpu.dot_dimension_numbers<[1], [0], [0], [1], [0, 0, 1, 1], [], []>} : vector<1x32xbf16>, vector<32x32xbf16>, vector<1x32xf32> -> vector<1x32xf32>
    %81 = arith.addf %78, %80 : vector<1x32xf32>
    %cst_50 = arith.constant 0.000000e+00 : f32
    %82 = vector.broadcast %cst_50 : f32 to vector<1x32xf32>
    %83 = arith.maximumf %81, %82 : vector<1x32xf32>
    %84 = arith.truncf %83 : vector<1x32xf32> to vector<1x32xbf16>
    %cst_51 = arith.constant dense<0.000000e+00> : vector<1x32xf32>
    %85 = tpu.matmul %84, %12, %cst_51 {dimension_numbers = #tpu.dot_dimension_numbers<[1], [0], [0], [1], [0, 0, 1, 1], [], []>} : vector<1x32xbf16>, vector<32x32xbf16>, vector<1x32xf32> -> vector<1x32xf32>
    %cst_52 = arith.constant 0.000000e+00 : f32
    %86 = vector.broadcast %cst_52 : f32 to vector<1x32xf32>
    %87 = arith.maximumf %85, %86 : vector<1x32xf32>
    %88 = arith.truncf %87 : vector<1x32xf32> to vector<1x32xbf16>
    %cst_53 = arith.constant dense<0.000000e+00> : vector<1x32xf32>
    %89 = tpu.matmul %88, %14, %cst_53 {dimension_numbers = #tpu.dot_dimension_numbers<[1], [0], [0], [1], [0, 0, 1, 1], [], []>} : vector<1x32xbf16>, vector<32x32xbf16>, vector<1x32xf32> -> vector<1x32xf32>
    %90 = arith.addf %8, %89 : vector<1x32xf32>
    %cst_54 = arith.constant 0.000000e+00 : f32
    %91 = vector.broadcast %cst_54 : f32 to vector<1x32xf32>
    %92 = arith.maximumf %90, %91 : vector<1x32xf32>
    %93 = arith.truncf %92 : vector<1x32xf32> to vector<1x32xbf16>
    %cst_55 = arith.constant dense<0.000000e+00> : vector<1x16xf32>
    %94 = tpu.matmul %93, %16, %cst_55 {dimension_numbers = #tpu.dot_dimension_numbers<[1], [0], [0], [1], [0, 0, 1, 1], [], []>} : vector<1x32xbf16>, vector<32x16xbf16>, vector<1x16xf32> -> vector<1x16xf32>
    %c0_56 = arith.constant 0 : index
    %c0_57 = arith.constant 0 : index
    %95 = vector.load %arg8[%c0_56, %c0_57] : memref<1x16xf32, #tpu.memory_space<vmem>>, vector<1x16xf32>
    tpu.vector_store %arg8[%c0_56, %c0_57], %94 {strides = array<i32>} : memref<1x16xf32, #tpu.memory_space<vmem>>, vector<1x16xf32>,
    return
  }
}

</mosaic_0001>

<llo_original>
// kernel: tpu_custom_call.1
$region0: #{tpu_custom_call.1}
  #allocation0 [shape = 'u32[]', space=smem, size = 0x4, offset = 0x4, fixed_abs, tag = 'smem constant byte address 0x4 - core index']
  #allocation1 [shape = 'u32[144,128]{1,0:T(1,128)}', space=vmem, size = 0x12000, scoped, tag = 'internal scratch']
  #allocation2 [shape = 'f32[8,32]{1,0:T(8,128)}', space=vmem, size = 0x1000, scoped, tag = 'scratch operand']
  %s0 = inlined_call_operand.hbm [shape: f32[8,16], index: 0, kind: input, shape index: {}]
  %s1 = inlined_call_operand.vmem [shape: f32[1,32], index: 1, kind: input, shape index: {}]
  %s2 = inlined_call_operand.vmem [shape: f32[16,64], index: 2, kind: input, shape index: {}]
  %s3 = inlined_call_operand.vmem [shape: f32[1,64], index: 3, kind: input, shape index: {}]
  %s4 = inlined_call_operand.vmem [shape: f32[32,32], index: 4, kind: input, shape index: {}]
  %s5 = inlined_call_operand.hbm [shape: f32[32,32], index: 5, kind: input, shape index: {}]
  %s6 = inlined_call_operand.hbm [shape: f32[32,32], index: 6, kind: input, shape index: {}]
  %s7 = inlined_call_operand.vmem [shape: f32[32,16], index: 7, kind: input, shape index: {}]
  %s8 = inlined_call_operand.hbm [shape: f32[1,16], index: 8, kind: output, shape index: {}]
  %s9 = sld [smem:[#allocation0]]
  $region54: #{tpu_custom_call.1} parent=0
    _
  %s11 = ssub.s32 1, %s9
  %s12 = scalar_select 0, %s11, %s9
  $region1: #{tpu_custom_call.1} parent=0
    #allocation3 [shape = 'u8[4096]{0}', space=vmem, size = 0x1000, scoped, tag = 'input window, operand 0, single buffered']
    #allocation4 [shape = 's32[1]{0}', space=sflag, size = 0x4, scoped, tag = 'scoped memory for tpu_custom_call.1']
    #allocation5 [shape = 's32[1]{0}', space=sflag, size = 0x4, scoped, tag = 'scoped memory for tpu_custom_call.1']
    #allocation6 [shape = 'u8[16384]{0}', space=vmem, size = 0x4000, scoped, tag = 'input window, operand 5, single buffered']
    #allocation7 [shape = 's32[1]{0}', space=sflag, size = 0x4, scoped, tag = 'scoped memory for tpu_custom_call.1']
    #allocation8 [shape = 'u8[16384]{0}', space=vmem, size = 0x4000, scoped, tag = 'input window, operand 6, single buffered']
    #allocation9 [shape = 'u8[512]{0}', space=vmem, size = 0x400, scoped, tag = 'output window, operand 0, single buffered']
    %13 = vsyncpa [#allocation4], 0
    %14 = vsyncpa [#allocation7], 0
    %15 = vsyncpa [#allocation5], 0
    // Predicated region
    $region2: #{tpu_custom_call.1} parent=1 // pred_check
      _
    $region3: #{tpu_custom_call.1} parent=1 // pred_check_branch
      %17 = sbr.rel (0) target = $region5
    $region4: #{tpu_custom_call.1} parent=1 // pred_region
      %s19 = ssub.s32 128, 128
      %20 = vsyncadd [#allocation4], %s19
      %s22 = sshll.u32 [#allocation3], 4
      %s23 = int_to_ptr.vmem [resolvable:$true] %s22
      %25 = dma.hbm_to_vmem [thread:$0]  %s0, 128, %s23, [#allocation4]
    $region5: #{tpu_custom_call.1} parent=1 // pred_fallthru
      _
    // Predicated region
    $region6: #{tpu_custom_call.1} parent=1 // pred_check
      _
    $region7: #{tpu_custom_call.1} parent=1 // pred_check_branch
      %27 = sbr.rel (0) target = $region9
    $region8: #{tpu_custom_call.1} parent=1 // pred_region
      _
    $region9: #{tpu_custom_call.1} parent=1 // pred_fallthru
      _
    // Predicated region
    $region10: #{tpu_custom_call.1} parent=1 // pred_check
      _
    $region11: #{tpu_custom_call.1} parent=1 // pred_check_branch
      %29 = sbr.rel (0) target = $region13
    $region12: #{tpu_custom_call.1} parent=1 // pred_region
      _
    $region13: #{tpu_custom_call.1} parent=1 // pred_fallthru
      _
    // Predicated region
    $region14: #{tpu_custom_call.1} parent=1 // pred_check
      _
    $region15: #{tpu_custom_call.1} parent=1 // pred_check_branch
      %31 = sbr.rel (0) target = $region17
    $region16: #{tpu_custom_call.1} parent=1 // pred_region
      _
    $region17: #{tpu_custom_call.1} parent=1 // pred_fallthru
      _
    // Predicated region
    $region18: #{tpu_custom_call.1} parent=1 // pred_check
      _
    $region19: #{tpu_custom_call.1} parent=1 // pred_check_branch
      %33 = sbr.rel (0) target = $region21
    $region20: #{tpu_custom_call.1} parent=1 // pred_region
      _
    $region21: #{tpu_custom_call.1} parent=1 // pred_fallthru
      _
    // Predicated region
    $region22: #{tpu_custom_call.1} parent=1 // pred_check
      _
    $region23: #{tpu_custom_call.1} parent=1 // pred_check_branch
      %35 = sbr.rel (0) target = $region25
    $region24: #{tpu_custom_call.1} parent=1 // pred_region
      %s37 = ssub.s32 512, 512
      %38 = vsyncadd [#allocation7], %s37
      %s39 = sshll.u32 [#allocation6], 4
      %s40 = int_to_ptr.vmem [resolvable:$true] %s39
      %45 = dma.hbm_to_vmem [thread:$0]  %s5, 512, %s40, [#allocation7], 128, 128, 8
    $region25: #{tpu_custom_call.1} parent=1 // pred_fallthru
      _
    // Predicated region
    $region26: #{tpu_custom_call.1} parent=1 // pred_check
      _
    $region27: #{tpu_custom_call.1} parent=1 // pred_check_branch
      %47 = sbr.rel (0) target = $region29
    $region28: #{tpu_custom_call.1} parent=1 // pred_region
      %s49 = ssub.s32 512, 512
      %50 = vsyncadd [#allocation7], %s49
      %s51 = sshll.u32 [#allocation8], 4
      %s52 = int_to_ptr.vmem [resolvable:$true] %s51
      %57 = dma.hbm_to_vmem [thread:$0]  %s6, 512, %s52, [#allocation7], 128, 128, 8
    $region29: #{tpu_custom_call.1} parent=1 // pred_fallthru
      _
    // Predicated region
    $region30: #{tpu_custom_call.1} parent=1 // pred_check
      _
    $region31: #{tpu_custom_call.1} parent=1 // pred_check_branch
      %59 = sbr.rel (0) target = $region33
    $region32: #{tpu_custom_call.1} parent=1 // pred_region
      _
    $region33: #{tpu_custom_call.1} parent=1 // pred_fallthru
      _
    // Predicated region
    $region34: #{tpu_custom_call.1} parent=1 // pred_check
      _
    $region35: #{tpu_custom_call.1} parent=1 // pred_check_branch
      %61 = sbr.rel (0) target = $region37
    $region36: #{tpu_custom_call.1} parent=1 // pred_region
      %62 = dma.done [#allocation4], 128
    $region37: #{tpu_custom_call.1} parent=1 // pred_fallthru
      _
    // Predicated region
    $region38: #{tpu_custom_call.1} parent=1 // pred_check
      _
    $region39: #{tpu_custom_call.1} parent=1 // pred_check_branch
      %64 = sbr.rel (0) target = $region41
    $region40: #{tpu_custom_call.1} parent=1 // pred_region
      %65 = dma.done [#allocation7], 512
    $region41: #{tpu_custom_call.1} parent=1 // pred_fallthru
      _
    // Predicated region
    $region42: #{tpu_custom_call.1} parent=1 // pred_check
      _
    $region43: #{tpu_custom_call.1} parent=1 // pred_check_branch
      %67 = sbr.rel (0) target = $region45
    $region44: #{tpu_custom_call.1} parent=1 // pred_region
      %68 = dma.done [#allocation7], 512
    $region45: #{tpu_custom_call.1} parent=1 // pred_fallthru
      _
    %v70 = vld [vmem:[#allocation3] sm:$0xff]
    %v71 = vld [vmem:[%s2] sm:$0xff]
    %v72 = vld [vmem:[%s2 + $0x8] sm:$0xff]
    %v73 = vld [vmem:[%s3] sm:$0x1]
    %v75 = vlaneseq
    %v76 = vshrl.u32 %v75, 7
    %v77 = vsub.s32 0, %v76
    %v78 = vrot.slane %v73, %v77
    %vm80 = vcmask 130048
    %v82 = vsel %vm80, %v70, 0
    %84 = vmatprep.subr.mxu0 0.0
    %85 = vmatpush1.msra.mxu0 0.0
    %86 = vmatprep.subr.mxu0 0.0
    %87 = vmatpush1.msra.mxu0 0.0
    %88 = vmatprep.subr.mxu0 0.0
    %89 = vmatpush1.msra.mxu0 0.0
    %90 = vmatprep.subr.mxu0 0.0
    %91 = vmatpush1.msra.mxu0 0.0
    %92 = vmatprep.subr.mxu0 0.0
    %93 = vmatpush1.msra.mxu0 0.0
    %94 = vmatprep.subr.mxu0 0.0
    %95 = vmatpush1.msra.mxu0 0.0
    %96 = vmatprep.subr.mxu0 0.0
    %97 = vmatpush1.msra.mxu0 0.0
    %98 = vmatprep.subr.mxu0 0.0
    %99 = vmatpush1.msra.mxu0 0.0
    %100 = vmatprep.subr.mxu0 0.0
    %101 = vmatpush1.msra.mxu0 0.0
    %102 = vmatprep.subr.mxu0 0.0
    %103 = vmatpush1.msra.mxu0 0.0
    %104 = vmatprep.subr.mxu0 0.0
    %105 = vmatpush1.msra.mxu0 0.0
    %106 = vmatprep.subr.mxu0 0.0
    %107 = vmatpush1.msra.mxu0 0.0
    %108 = vmatprep.subr.mxu0 0.0
    %109 = vmatpush1.msra.mxu0 0.0
    %110 = vmatprep.subr.mxu0 0.0
    %111 = vmatpush1.msra.mxu0 0.0
    %112 = vmatprep.subr.mxu0 0.0
    %113 = vmatpush1.msra.mxu0 %v72
    %114 = vmatprep.subr.mxu0 0.0
    %115 = vmatpush1.msra.mxu0 %v71
    %116 = vmatprep.subr.mxu0 0.0
    %117 = vmatpush2.msra.mxu0 0.0
    %118 = vmatprep.subr.mxu0 0.0
    %119 = vmatpush2.msra.mxu0 0.0
    %120 = vmatprep.subr.mxu0 0.0
    %121 = vmatpush2.msra.mxu0 0.0
    %122 = vmatprep.subr.mxu0 0.0
    %123 = vmatpush2.msra.mxu0 0.0
    %124 = vmatprep.subr.mxu0 0.0
    %125 = vmatpush2.msra.mxu0 0.0
    %126 = vmatprep.subr.mxu0 0.0
    %127 = vmatpush2.msra.mxu0 0.0
    %128 = vmatprep.subr.mxu0 0.0
    %129 = vmatpush2.msra.mxu0 0.0
    %130 = vmatprep.subr.mxu0 0.0
    %131 = vmatpush2.msra.mxu0 0.0
    %132 = vmatprep.subr.mxu0 0.0
    %133 = vmatpush2.msra.mxu0 0.0
    %134 = vmatprep.subr.mxu0 0.0
    %135 = vmatpush2.msra.mxu0 0.0
    %136 = vmatprep.subr.mxu0 0.0
    %137 = vmatpush2.msra.mxu0 0.0
    %138 = vmatprep.subr.mxu0 0.0
    %139 = vmatpush2.msra.mxu0 0.0
    %140 = vmatprep.subr.mxu0 0.0
    %141 = vmatpush2.msra.mxu0 0.0
    %142 = vmatprep.subr.mxu0 0.0
    %143 = vmatpush2.msra.mxu0 0.0
    %144 = vmatprep.subr.mxu0 0.0
    %145 = vmatpush2.msra.mxu0 0.0
    %146 = vmatprep.subr.mxu0 0.0
    %147 = vmatpush2.msra.mxu0 0.0
    %148 = vmatprep.mubr.f32.mxu0 0.0
    %149 = vmatmul.mubr.f32.gmra.mxu0 %v82
    %v150 = vpop.f32.mrf.mxu0
    %v151 = vadd.f32 %v78, %v150
    %v152 = vpop.f32.mrf.mxu0
    %153 = vdwg.mxu0
    %vm154 = vcmask 261120
    %155 = vst.msk [vmem:[#allocation2] sm:$0xff] %vm154, %v151
    %v156 = vld [vmem:[%s4] sm:$0xff]
    %v157 = vld [vmem:[%s4 + $0x8] sm:$0xff]
    %v158 = vld [vmem:[%s4 + $0x10] sm:$0xff]
    %v159 = vld [vmem:[%s4 + $0x18] sm:$0xff]
    %v160 = vpack.c.bf16 %v157, %v156
    %v161 = vpack.c.bf16 %v159, %v158
    %v162 = vld [vmem:[#allocation6] sm:$0xff]
    %v163 = vld [vmem:[#allocation6 + $0x8] sm:$0xff]
    %v164 = vld [vmem:[#allocation6 + $0x10] sm:$0xff]
    %v165 = vld [vmem:[#allocation6 + $0x18] sm:$0xff]
    %v166 = vpack.c.bf16 %v163, %v162
    %v167 = vpack.c.bf16 %v165, %v164
    %v168 = vld [vmem:[#allocation8] sm:$0xff]
    %v169 = vld [vmem:[#allocation8 + $0x8] sm:$0xff]
    %v170 = vld [vmem:[#allocation8 + $0x10] sm:$0xff]
    %v171 = vld [vmem:[#allocation8 + $0x18] sm:$0xff]
    %v172 = vpack.c.bf16 %v169, %v168
    %v173 = vpack.c.bf16 %v171, %v170
    %v174 = vld [vmem:[%s7] sm:$0xff]
    %v175 = vld [vmem:[%s7 + $0x8] sm:$0xff]
    %v176 = vld [vmem:[%s7 + $0x10] sm:$0xff]
    %v177 = vld [vmem:[%s7 + $0x18] sm:$0xff]
    %v178 = vpack.c.bf16 %v175, %v174
    %v179 = vpack.c.bf16 %v177, %v176
    %v180 = vld [vmem:[%s1] sm:$0x1]
    %v181 = vld [vmem:[#allocation2] sm:$0x1]
    %v182 = vpack.c.bf16 %v180, %v180
    %v184 = vsel %vm154, %v182, 0
    %186 = vmatprep.subr.bf16.mxu0 0
    %187 = vmatpush1.bf16.msra.mxu0 0
    %188 = vmatprep.subr.bf16.mxu0 0
    %189 = vmatpush1.bf16.msra.mxu0 0
    %190 = vmatprep.subr.bf16.mxu0 0
    %191 = vmatpush1.bf16.msra.mxu0 0
    %192 = vmatprep.subr.bf16.mxu0 0
    %193 = vmatpush1.bf16.msra.mxu0 0
    %194 = vmatprep.subr.bf16.mxu0 0
    %195 = vmatpush1.bf16.msra.mxu0 0
    %196 = vmatprep.subr.bf16.mxu0 0
    %197 = vmatpush1.bf16.msra.mxu0 0
    %198 = vmatprep.subr.bf16.mxu0 0
    %199 = vmatpush1.bf16.msra.mxu0 %v161
    %200 = vmatprep.subr.bf16.mxu0 0
    %201 = vmatpush1.bf16.msra.mxu0 %v160
    %202 = vmatprep.subr.bf16.mxu0 0
    %203 = vmatpush2.bf16.msra.mxu0 0
    %204 = vmatprep.subr.bf16.mxu0 0
    %205 = vmatpush2.bf16.msra.mxu0 0
    %206 = vmatprep.subr.bf16.mxu0 0
    %207 = vmatpush2.bf16.msra.mxu0 0
    %208 = vmatprep.subr.bf16.mxu0 0
    %209 = vmatpush2.bf16.msra.mxu0 0
    %210 = vmatprep.subr.bf16.mxu0 0
    %211 = vmatpush2.bf16.msra.mxu0 0
    %212 = vmatprep.subr.bf16.mxu0 0
    %213 = vmatpush2.bf16.msra.mxu0 0
    %214 = vmatprep.subr.bf16.mxu0 0
    %215 = vmatpush2.bf16.msra.mxu0 0
    %216 = vmatprep.subr.bf16.mxu0 0
    %217 = vmatpush2.bf16.msra.mxu0 0
    %218 = vmatprep.mubr.bf16.mxu0 0
    %219 = vmatmul.mubr.bf16.gmra.mxu0 %v184
    %v220 = vpop.f32.mrf.mxu0
    %v221 = vadd.f32 0.0, %v220
    %v222 = vpop.f32.mrf.mxu0
    %v223 = vpop.f32.mrf.mxu0
    %v224 = vpop.f32.mrf.mxu0
    %225 = vdwg.mxu0
    %v226 = vadd.f32 %v181, %v221
    %v227 = vmax.f32 %v226, 0.0
    %v228 = vpack.c.bf16 %v227, %v227
    %v230 = vsel %vm154, %v228, 0
    %232 = vmatprep.subr.bf16.mxu0 0
    %233 = vmatpush1.bf16.msra.mxu0 0
    %234 = vmatprep.subr.bf16.mxu0 0
    %235 = vmatpush1.bf16.msra.mxu0 0
    %236 = vmatprep.subr.bf16.mxu0 0
    %237 = vmatpush1.bf16.msra.mxu0 0
    %238 = vmatprep.subr.bf16.mxu0 0
    %239 = vmatpush1.bf16.msra.mxu0 0
    %240 = vmatprep.subr.bf16.mxu0 0
    %241 = vmatpush1.bf16.msra.mxu0 0
    %242 = vmatprep.subr.bf16.mxu0 0
    %243 = vmatpush1.bf16.msra.mxu0 0
    %244 = vmatprep.subr.bf16.mxu0 0
    %245 = vmatpush1.bf16.msra.mxu0 %v167
    %246 = vmatprep.subr.bf16.mxu0 0
    %247 = vmatpush1.bf16.msra.mxu0 %v166
    %248 = vmatprep.subr.bf16.mxu0 0
    %249 = vmatpush2.bf16.msra.mxu0 0
    %250 = vmatprep.subr.bf16.mxu0 0
    %251 = vmatpush2.bf16.msra.mxu0 0
    %252 = vmatprep.subr.bf16.mxu0 0
    %253 = vmatpush2.bf16.msra.mxu0 0
    %254 = vmatprep.subr.bf16.mxu0 0
    %255 = vmatpush2.bf16.msra.mxu0 0
    %256 = vmatprep.subr.bf16.mxu0 0
    %257 = vmatpush2.bf16.msra.mxu0 0
    %258 = vmatprep.subr.bf16.mxu0 0
    %259 = vmatpush2.bf16.msra.mxu0 0
    %260 = vmatprep.subr.bf16.mxu0 0
    %261 = vmatpush2.bf16.msra.mxu0 0
    %262 = vmatprep.subr.bf16.mxu0 0
    %263 = vmatpush2.bf16.msra.mxu0 0
    %264 = vmatprep.mubr.bf16.mxu0 0
    %265 = vmatmul.mubr.bf16.gmra.mxu0 %v230
    %v266 = vpop.f32.mrf.mxu0
    %v267 = vadd.f32 0.0, %v266
    %v268 = vpop.f32.mrf.mxu0
    %v269 = vpop.f32.mrf.mxu0
    %v270 = vpop.f32.mrf.mxu0
    %271 = vdwg.mxu0
    %v272 = vmax.f32 %v267, 0.0
    %v273 = vld [vmem:[#allocation2 + $0x1] sm:$0x1]
    %v274 = vpack.c.bf16 %v272, %v272
    %v276 = vsel %vm154, %v274, 0
    %278 = vmatprep.subr.bf16.mxu0 0
    %279 = vmatpush1.bf16.msra.mxu0 0
    %280 = vmatprep.subr.bf16.mxu0 0
    %281 = vmatpush1.bf16.msra.mxu0 0
    %282 = vmatprep.subr.bf16.mxu0 0
    %283 = vmatpush1.bf16.msra.mxu0 0
    %284 = vmatprep.subr.bf16.mxu0 0
    %285 = vmatpush1.bf16.msra.mxu0 0
    %286 = vmatprep.subr.bf16.mxu0 0
    %287 = vmatpush1.bf16.msra.mxu0 0
    %288 = vmatprep.subr.bf16.mxu0 0
    %289 = vmatpush1.bf16.msra.mxu0 0
    %290 = vmatprep.subr.bf16.mxu0 0
    %291 = vmatpush1.bf16.msra.mxu0 %v161
    %292 = vmatprep.subr.bf16.mxu0 0
    %293 = vmatpush1.bf16.msra.mxu0 %v160
    %294 = vmatprep.subr.bf16.mxu0 0
    %295 = vmatpush2.bf16.msra.mxu0 0
    %296 = vmatprep.subr.bf16.mxu0 0
    %297 = vmatpush2.bf16.msra.mxu0 0
    %298 = vmatprep.subr.bf16.mxu0 0
    %299 = vmatpush2.bf16.msra.mxu0 0
    %300 = vmatprep.subr.bf16.mxu0 0
    %301 = vmatpush2.bf16.msra.mxu0 0
    %302 = vmatprep.subr.bf16.mxu0 0
    %303 = vmatpush2.bf16.msra.mxu0 0
    %304 = vmatprep.subr.bf16.mxu0 0
    %305 = vmatpush2.bf16.msra.mxu0 0
    %306 = vmatprep.subr.bf16.mxu0 0
    %307 = vmatpush2.bf16.msra.mxu0 0
    %308 = vmatprep.subr.bf16.mxu0 0
    %309 = vmatpush2.bf16.msra.mxu0 0
    %310 = vmatprep.mubr.bf16.mxu0 0
    %311 = vmatmul.mubr.bf16.gmra.mxu0 %v276
    %v312 = vpop.f32.mrf.mxu0
    %v313 = vadd.f32 0.0, %v312
    %v314 = vpop.f32.mrf.mxu0
    %v315 = vpop.f32.mrf.mxu0
    %v316 = vpop.f32.mrf.mxu0
    %317 = vdwg.mxu0
    %v318 = vadd.f32 %v273, %v313
    %v319 = vmax.f32 %v318, 0.0
    %v320 = vpack.c.bf16 %v319, %v319
    %v322 = vsel %vm154, %v320, 0
    %324 = vmatprep.subr.bf16.mxu0 0
    %325 = vmatpush1.bf16.msra.mxu0 0
    %326 = vmatprep.subr.bf16.mxu0 0
    %327 = vmatpush1.bf16.msra.mxu0 0
    %328 = vmatprep.subr.bf16.mxu0 0
    %329 = vmatpush1.bf16.msra.mxu0 0
    %330 = vmatprep.subr.bf16.mxu0 0
    %331 = vmatpush1.bf16.msra.mxu0 0
    %332 = vmatprep.subr.bf16.mxu0 0
    %333 = vmatpush1.bf16.msra.mxu0 0
    %334 = vmatprep.subr.bf16.mxu0 0
    %335 = vmatpush1.bf16.msra.mxu0 0
    %336 = vmatprep.subr.bf16.mxu0 0
    %337 = vmatpush1.bf16.msra.mxu0 %v167
    %338 = vmatprep.subr.bf16.mxu0 0
    %339 = vmatpush1.bf16.msra.mxu0 %v166
    %340 = vmatprep.subr.bf16.mxu0 0
    %341 = vmatpush2.bf16.msra.mxu0 0
    %342 = vmatprep.subr.bf16.mxu0 0
    %343 = vmatpush2.bf16.msra.mxu0 0
    %344 = vmatprep.subr.bf16.mxu0 0
    %345 = vmatpush2.bf16.msra.mxu0 0
    %346 = vmatprep.subr.bf16.mxu0 0
    %347 = vmatpush2.bf16.msra.mxu0 0
    %348 = vmatprep.subr.bf16.mxu0 0
    %349 = vmatpush2.bf16.msra.mxu0 0
    %350 = vmatprep.subr.bf16.mxu0 0
    %351 = vmatpush2.bf16.msra.mxu0 0
    %352 = vmatprep.subr.bf16.mxu0 0
    %353 = vmatpush2.bf16.msra.mxu0 0
    %354 = vmatprep.subr.bf16.mxu0 0
    %355 = vmatpush2.bf16.msra.mxu0 0
    %356 = vmatprep.mubr.bf16.mxu0 0
    %357 = vmatmul.mubr.bf16.gmra.mxu0 %v322
    %v358 = vpop.f32.mrf.mxu0
    %v359 = vadd.f32 0.0, %v358
    %v360 = vpop.f32.mrf.mxu0
    %v361 = vpop.f32.mrf.mxu0
    %v362 = vpop.f32.mrf.mxu0
    %363 = vdwg.mxu0
    %v364 = vmax.f32 %v359, 0.0
    %v365 = vld [vmem:[#allocation2 + $0x2] sm:$0x1]
    %v366 = vpack.c.bf16 %v364, %v364
    %v368 = vsel %vm154, %v366, 0
    %370 = vmatprep.subr.bf16.mxu0 0
    %371 = vmatpush1.bf16.msra.mxu0 0
    %372 = vmatprep.subr.bf16.mxu0 0
    %373 = vmatpush1.bf16.msra.mxu0 0
    %374 = vmatprep.subr.bf16.mxu0 0
    %375 = vmatpush1.bf16.msra.mxu0 0
    %376 = vmatprep.subr.bf16.mxu0 0
    %377 = vmatpush1.bf16.msra.mxu0 0
    %378 = vmatprep.subr.bf16.mxu0 0
    %379 = vmatpush1.bf16.msra.mxu0 0
    %380 = vmatprep.subr.bf16.mxu0 0
    %381 = vmatpush1.bf16.msra.mxu0 0
    %382 = vmatprep.subr.bf16.mxu0 0
    %383 = vmatpush1.bf16.msra.mxu0 %v161
    %384 = vmatprep.subr.bf16.mxu0 0
    %385 = vmatpush1.bf16.msra.mxu0 %v160
    %386 = vmatprep.subr.bf16.mxu0 0
    %387 = vmatpush2.bf16.msra.mxu0 0
    %388 = vmatprep.subr.bf16.mxu0 0
    %389 = vmatpush2.bf16.msra.mxu0 0
    %390 = vmatprep.subr.bf16.mxu0 0
    %391 = vmatpush2.bf16.msra.mxu0 0
    %392 = vmatprep.subr.bf16.mxu0 0
    %393 = vmatpush2.bf16.msra.mxu0 0
    %394 = vmatprep.subr.bf16.mxu0 0
    %395 = vmatpush2.bf16.msra.mxu0 0
    %396 = vmatprep.subr.bf16.mxu0 0
    %397 = vmatpush2.bf16.msra.mxu0 0
    %398 = vmatprep.subr.bf16.mxu0 0
    %399 = vmatpush2.bf16.msra.mxu0 0
    %400 = vmatprep.subr.bf16.mxu0 0
    %401 = vmatpush2.bf16.msra.mxu0 0
    %402 = vmatprep.mubr.bf16.mxu0 0
    %403 = vmatmul.mubr.bf16.gmra.mxu0 %v368
    %v404 = vpop.f32.mrf.mxu0
    %v405 = vadd.f32 0.0, %v404
    %v406 = vpop.f32.mrf.mxu0
    %v407 = vpop.f32.mrf.mxu0
    %v408 = vpop.f32.mrf.mxu0
    %409 = vdwg.mxu0
    %v410 = vadd.f32 %v365, %v405
    %v411 = vmax.f32 %v410, 0.0
    %v412 = vpack.c.bf16 %v411, %v411
    %v414 = vsel %vm154, %v412, 0
    %416 = vmatprep.subr.bf16.mxu0 0
    %417 = vmatpush1.bf16.msra.mxu0 0
    %418 = vmatprep.subr.bf16.mxu0 0
    %419 = vmatpush1.bf16.msra.mxu0 0
    %420 = vmatprep.subr.bf16.mxu0 0
    %421 = vmatpush1.bf16.msra.mxu0 0
    %422 = vmatprep.subr.bf16.mxu0 0
    %423 = vmatpush1.bf16.msra.mxu0 0
    %424 = vmatprep.subr.bf16.mxu0 0
    %425 = vmatpush1.bf16.msra.mxu0 0
    %426 = vmatprep.subr.bf16.mxu0 0
    %427 = vmatpush1.bf16.msra.mxu0 0
    %428 = vmatprep.subr.bf16.mxu0 0
    %429 = vmatpush1.bf16.msra.mxu0 %v167
    %430 = vmatprep.subr.bf16.mxu0 0
    %431 = vmatpush1.bf16.msra.mxu0 %v166
    %432 = vmatprep.subr.bf16.mxu0 0
    %433 = vmatpush2.bf16.msra.mxu0 0
    %434 = vmatprep.subr.bf16.mxu0 0
    %435 = vmatpush2.bf16.msra.mxu0 0
    %436 = vmatprep.subr.bf16.mxu0 0
    %437 = vmatpush2.bf16.msra.mxu0 0
    %438 = vmatprep.subr.bf16.mxu0 0
    %439 = vmatpush2.bf16.msra.mxu0 0
    %440 = vmatprep.subr.bf16.mxu0 0
    %441 = vmatpush2.bf16.msra.mxu0 0
    %442 = vmatprep.subr.bf16.mxu0 0
    %443 = vmatpush2.bf16.msra.mxu0 0
    %444 = vmatprep.subr.bf16.mxu0 0
    %445 = vmatpush2.bf16.msra.mxu0 0
    %446 = vmatprep.subr.bf16.mxu0 0
    %447 = vmatpush2.bf16.msra.mxu0 0
    %448 = vmatprep.mubr.bf16.mxu0 0
    %449 = vmatmul.mubr.bf16.gmra.mxu0 %v414
    %v450 = vpop.f32.mrf.mxu0
    %v451 = vadd.f32 0.0, %v450
    %v452 = vpop.f32.mrf.mxu0
    %v453 = vpop.f32.mrf.mxu0
    %v454 = vpop.f32.mrf.mxu0
    %455 = vdwg.mxu0
    %v456 = vmax.f32 %v451, 0.0
    %v457 = vld [vmem:[#allocation2 + $0x3] sm:$0x1]
    %v458 = vpack.c.bf16 %v456, %v456
    %v460 = vsel %vm154, %v458, 0
    %462 = vmatprep.subr.bf16.mxu0 0
    %463 = vmatpush1.bf16.msra.mxu0 0
    %464 = vmatprep.subr.bf16.mxu0 0
    %465 = vmatpush1.bf16.msra.mxu0 0
    %466 = vmatprep.subr.bf16.mxu0 0
    %467 = vmatpush1.bf16.msra.mxu0 0
    %468 = vmatprep.subr.bf16.mxu0 0
    %469 = vmatpush1.bf16.msra.mxu0 0
    %470 = vmatprep.subr.bf16.mxu0 0
    %471 = vmatpush1.bf16.msra.mxu0 0
    %472 = vmatprep.subr.bf16.mxu0 0
    %473 = vmatpush1.bf16.msra.mxu0 0
    %474 = vmatprep.subr.bf16.mxu0 0
    %475 = vmatpush1.bf16.msra.mxu0 %v161
    %476 = vmatprep.subr.bf16.mxu0 0
    %477 = vmatpush1.bf16.msra.mxu0 %v160
    %478 = vmatprep.subr.bf16.mxu0 0
    %479 = vmatpush2.bf16.msra.mxu0 0
    %480 = vmatprep.subr.bf16.mxu0 0
    %481 = vmatpush2.bf16.msra.mxu0 0
    %482 = vmatprep.subr.bf16.mxu0 0
    %483 = vmatpush2.bf16.msra.mxu0 0
    %484 = vmatprep.subr.bf16.mxu0 0
    %485 = vmatpush2.bf16.msra.mxu0 0
    %486 = vmatprep.subr.bf16.mxu0 0
    %487 = vmatpush2.bf16.msra.mxu0 0
    %488 = vmatprep.subr.bf16.mxu0 0
    %489 = vmatpush2.bf16.msra.mxu0 0
    %490 = vmatprep.subr.bf16.mxu0 0
    %491 = vmatpush2.bf16.msra.mxu0 0
    %492 = vmatprep.subr.bf16.mxu0 0
    %493 = vmatpush2.bf16.msra.mxu0 0
    %494 = vmatprep.mubr.bf16.mxu0 0
    %495 = vmatmul.mubr.bf16.gmra.mxu0 %v460
    %v496 = vpop.f32.mrf.mxu0
    %v497 = vadd.f32 0.0, %v496
    %v498 = vpop.f32.mrf.mxu0
    %v499 = vpop.f32.mrf.mxu0
    %v500 = vpop.f32.mrf.mxu0
    %501 = vdwg.mxu0
    %v502 = vadd.f32 %v457, %v497
    %v503 = vmax.f32 %v502, 0.0
    %v504 = vpack.c.bf16 %v503, %v503
    %v506 = vsel %vm154, %v504, 0
    %508 = vmatprep.subr.bf16.mxu0 0
    %509 = vmatpush1.bf16.msra.mxu0 0
    %510 = vmatprep.subr.bf16.mxu0 0
    %511 = vmatpush1.bf16.msra.mxu0 0
    %512 = vmatprep.subr.bf16.mxu0 0
    %513 = vmatpush1.bf16.msra.mxu0 0
    %514 = vmatprep.subr.bf16.mxu0 0
    %515 = vmatpush1.bf16.msra.mxu0 0
    %516 = vmatprep.subr.bf16.mxu0 0
    %517 = vmatpush1.bf16.msra.mxu0 0
    %518 = vmatprep.subr.bf16.mxu0 0
    %519 = vmatpush1.bf16.msra.mxu0 0
    %520 = vmatprep.subr.bf16.mxu0 0
    %521 = vmatpush1.bf16.msra.mxu0 %v167
    %522 = vmatprep.subr.bf16.mxu0 0
    %523 = vmatpush1.bf16.msra.mxu0 %v166
    %524 = vmatprep.subr.bf16.mxu0 0
    %525 = vmatpush2.bf16.msra.mxu0 0
    %526 = vmatprep.subr.bf16.mxu0 0
    %527 = vmatpush2.bf16.msra.mxu0 0
    %528 = vmatprep.subr.bf16.mxu0 0
    %529 = vmatpush2.bf16.msra.mxu0 0
    %530 = vmatprep.subr.bf16.mxu0 0
    %531 = vmatpush2.bf16.msra.mxu0 0
    %532 = vmatprep.subr.bf16.mxu0 0
    %533 = vmatpush2.bf16.msra.mxu0 0
    %534 = vmatprep.subr.bf16.mxu0 0
    %535 = vmatpush2.bf16.msra.mxu0 0
    %536 = vmatprep.subr.bf16.mxu0 0
    %537 = vmatpush2.bf16.msra.mxu0 0
    %538 = vmatprep.subr.bf16.mxu0 0
    %539 = vmatpush2.bf16.msra.mxu0 0
    %540 = vmatprep.mubr.bf16.mxu0 0
    %541 = vmatmul.mubr.bf16.gmra.mxu0 %v506
    %v542 = vpop.f32.mrf.mxu0
    %v543 = vadd.f32 0.0, %v542
    %v544 = vpop.f32.mrf.mxu0
    %v545 = vpop.f32.mrf.mxu0
    %v546 = vpop.f32.mrf.mxu0
    %547 = vdwg.mxu0
    %v548 = vmax.f32 %v543, 0.0
    %v549 = vld [vmem:[#allocation2 + $0x4] sm:$0x1]
    %v550 = vpack.c.bf16 %v548, %v548
    %v552 = vsel %vm154, %v550, 0
    %554 = vmatprep.subr.bf16.mxu0 0
    %555 = vmatpush1.bf16.msra.mxu0 0
    %556 = vmatprep.subr.bf16.mxu0 0
    %557 = vmatpush1.bf16.msra.mxu0 0
    %558 = vmatprep.subr.bf16.mxu0 0
    %559 = vmatpush1.bf16.msra.mxu0 0
    %560 = vmatprep.subr.bf16.mxu0 0
    %561 = vmatpush1.bf16.msra.mxu0 0
    %562 = vmatprep.subr.bf16.mxu0 0
    %563 = vmatpush1.bf16.msra.mxu0 0
    %564 = vmatprep.subr.bf16.mxu0 0
    %565 = vmatpush1.bf16.msra.mxu0 0
    %566 = vmatprep.subr.bf16.mxu0 0
    %567 = vmatpush1.bf16.msra.mxu0 %v161
    %568 = vmatprep.subr.bf16.mxu0 0
    %569 = vmatpush1.bf16.msra.mxu0 %v160
    %570 = vmatprep.subr.bf16.mxu0 0
    %571 = vmatpush2.bf16.msra.mxu0 0
    %572 = vmatprep.subr.bf16.mxu0 0
    %573 = vmatpush2.bf16.msra.mxu0 0
    %574 = vmatprep.subr.bf16.mxu0 0
    %575 = vmatpush2.bf16.msra.mxu0 0
    %576 = vmatprep.subr.bf16.mxu0 0
    %577 = vmatpush2.bf16.msra.mxu0 0
    %578 = vmatprep.subr.bf16.mxu0 0
    %579 = vmatpush2.bf16.msra.mxu0 0
    %580 = vmatprep.subr.bf16.mxu0 0
    %581 = vmatpush2.bf16.msra.mxu0 0
    %582 = vmatprep.subr.bf16.mxu0 0
    %583 = vmatpush2.bf16.msra.mxu0 0
    %584 = vmatprep.subr.bf16.mxu0 0
    %585 = vmatpush2.bf16.msra.mxu0 0
    %586 = vmatprep.mubr.bf16.mxu0 0
    %587 = vmatmul.mubr.bf16.gmra.mxu0 %v552
    %v588 = vpop.f32.mrf.mxu0
    %v589 = vadd.f32 0.0, %v588
    %v590 = vpop.f32.mrf.mxu0
    %v591 = vpop.f32.mrf.mxu0
    %v592 = vpop.f32.mrf.mxu0
    %593 = vdwg.mxu0
    %v594 = vadd.f32 %v549, %v589
    %v595 = vmax.f32 %v594, 0.0
    %v596 = vpack.c.bf16 %v595, %v595
    %v598 = vsel %vm154, %v596, 0
    %600 = vmatprep.subr.bf16.mxu0 0
    %601 = vmatpush1.bf16.msra.mxu0 0
    %602 = vmatprep.subr.bf16.mxu0 0
    %603 = vmatpush1.bf16.msra.mxu0 0
    %604 = vmatprep.subr.bf16.mxu0 0
    %605 = vmatpush1.bf16.msra.mxu0 0
    %606 = vmatprep.subr.bf16.mxu0 0
    %607 = vmatpush1.bf16.msra.mxu0 0
    %608 = vmatprep.subr.bf16.mxu0 0
    %609 = vmatpush1.bf16.msra.mxu0 0
    %610 = vmatprep.subr.bf16.mxu0 0
    %611 = vmatpush1.bf16.msra.mxu0 0
    %612 = vmatprep.subr.bf16.mxu0 0
    %613 = vmatpush1.bf16.msra.mxu0 %v167
    %614 = vmatprep.subr.bf16.mxu0 0
    %615 = vmatpush1.bf16.msra.mxu0 %v166
    %616 = vmatprep.subr.bf16.mxu0 0
    %617 = vmatpush2.bf16.msra.mxu0 0
    %618 = vmatprep.subr.bf16.mxu0 0
    %619 = vmatpush2.bf16.msra.mxu0 0
    %620 = vmatprep.subr.bf16.mxu0 0
    %621 = vmatpush2.bf16.msra.mxu0 0
    %622 = vmatprep.subr.bf16.mxu0 0
    %623 = vmatpush2.bf16.msra.mxu0 0
    %624 = vmatprep.subr.bf16.mxu0 0
    %625 = vmatpush2.bf16.msra.mxu0 0
    %626 = vmatprep.subr.bf16.mxu0 0
    %627 = vmatpush2.bf16.msra.mxu0 0
    %628 = vmatprep.subr.bf16.mxu0 0
    %629 = vmatpush2.bf16.msra.mxu0 0
    %630 = vmatprep.subr.bf16.mxu0 0
    %631 = vmatpush2.bf16.msra.mxu0 0
    %632 = vmatprep.mubr.bf16.mxu0 0
    %633 = vmatmul.mubr.bf16.gmra.mxu0 %v598
    %v634 = vpop.f32.mrf.mxu0
    %v635 = vadd.f32 0.0, %v634
    %v636 = vpop.f32.mrf.mxu0
    %v637 = vpop.f32.mrf.mxu0
    %v638 = vpop.f32.mrf.mxu0
    %639 = vdwg.mxu0
    %v640 = vmax.f32 %v635, 0.0
    %v641 = vld [vmem:[#allocation2 + $0x5] sm:$0x1]
    %v642 = vpack.c.bf16 %v640, %v640
    %v644 = vsel %vm154, %v642, 0
    %646 = vmatprep.subr.bf16.mxu0 0
    %647 = vmatpush1.bf16.msra.mxu0 0
    %648 = vmatprep.subr.bf16.mxu0 0
    %649 = vmatpush1.bf16.msra.mxu0 0
    %650 = vmatprep.subr.bf16.mxu0 0
    %651 = vmatpush1.bf16.msra.mxu0 0
    %652 = vmatprep.subr.bf16.mxu0 0
    %653 = vmatpush1.bf16.msra.mxu0 0
    %654 = vmatprep.subr.bf16.mxu0 0
    %655 = vmatpush1.bf16.msra.mxu0 0
    %656 = vmatprep.subr.bf16.mxu0 0
    %657 = vmatpush1.bf16.msra.mxu0 0
    %658 = vmatprep.subr.bf16.mxu0 0
    %659 = vmatpush1.bf16.msra.mxu0 %v161
    %660 = vmatprep.subr.bf16.mxu0 0
    %661 = vmatpush1.bf16.msra.mxu0 %v160
    %662 = vmatprep.subr.bf16.mxu0 0
    %663 = vmatpush2.bf16.msra.mxu0 0
    %664 = vmatprep.subr.bf16.mxu0 0
    %665 = vmatpush2.bf16.msra.mxu0 0
    %666 = vmatprep.subr.bf16.mxu0 0
    %667 = vmatpush2.bf16.msra.mxu0 0
    %668 = vmatprep.subr.bf16.mxu0 0
    %669 = vmatpush2.bf16.msra.mxu0 0
    %670 = vmatprep.subr.bf16.mxu0 0
    %671 = vmatpush2.bf16.msra.mxu0 0
    %672 = vmatprep.subr.bf16.mxu0 0
    %673 = vmatpush2.bf16.msra.mxu0 0
    %674 = vmatprep.subr.bf16.mxu0 0
    %675 = vmatpush2.bf16.msra.mxu0 0
    %676 = vmatprep.subr.bf16.mxu0 0
    %677 = vmatpush2.bf16.msra.mxu0 0
    %678 = vmatprep.mubr.bf16.mxu0 0
    %679 = vmatmul.mubr.bf16.gmra.mxu0 %v644
    %v680 = vpop.f32.mrf.mxu0
    %v681 = vadd.f32 0.0, %v680
    %v682 = vpop.f32.mrf.mxu0
    %v683 = vpop.f32.mrf.mxu0
    %v684 = vpop.f32.mrf.mxu0
    %685 = vdwg.mxu0
    %v686 = vadd.f32 %v641, %v681
    %v687 = vmax.f32 %v686, 0.0
    %v688 = vpack.c.bf16 %v687, %v687
    %v690 = vsel %vm154, %v688, 0
    %692 = vmatprep.subr.bf16.mxu0 0
    %693 = vmatpush1.bf16.msra.mxu0 0
    %694 = vmatprep.subr.bf16.mxu0 0
    %695 = vmatpush1.bf16.msra.mxu0 0
    %696 = vmatprep.subr.bf16.mxu0 0
    %697 = vmatpush1.bf16.msra.mxu0 0
    %698 = vmatprep.subr.bf16.mxu0 0
    %699 = vmatpush1.bf16.msra.mxu0 0
    %700 = vmatprep.subr.bf16.mxu0 0
    %701 = vmatpush1.bf16.msra.mxu0 0
    %702 = vmatprep.subr.bf16.mxu0 0
    %703 = vmatpush1.bf16.msra.mxu0 0
    %704 = vmatprep.subr.bf16.mxu0 0
    %705 = vmatpush1.bf16.msra.mxu0 %v167
    %706 = vmatprep.subr.bf16.mxu0 0
    %707 = vmatpush1.bf16.msra.mxu0 %v166
    %708 = vmatprep.subr.bf16.mxu0 0
    %709 = vmatpush2.bf16.msra.mxu0 0
    %710 = vmatprep.subr.bf16.mxu0 0
    %711 = vmatpush2.bf16.msra.mxu0 0
    %712 = vmatprep.subr.bf16.mxu0 0
    %713 = vmatpush2.bf16.msra.mxu0 0
    %714 = vmatprep.subr.bf16.mxu0 0
    %715 = vmatpush2.bf16.msra.mxu0 0
    %716 = vmatprep.subr.bf16.mxu0 0
    %717 = vmatpush2.bf16.msra.mxu0 0
    %718 = vmatprep.subr.bf16.mxu0 0
    %719 = vmatpush2.bf16.msra.mxu0 0
    %720 = vmatprep.subr.bf16.mxu0 0
    %721 = vmatpush2.bf16.msra.mxu0 0
    %722 = vmatprep.subr.bf16.mxu0 0
    %723 = vmatpush2.bf16.msra.mxu0 0
    %724 = vmatprep.mubr.bf16.mxu0 0
    %725 = vmatmul.mubr.bf16.gmra.mxu0 %v690
    %v726 = vpop.f32.mrf.mxu0
    %v727 = vadd.f32 0.0, %v726
    %v728 = vpop.f32.mrf.mxu0
    %v729 = vpop.f32.mrf.mxu0
    %v730 = vpop.f32.mrf.mxu0
    %731 = vdwg.mxu0
    %v732 = vmax.f32 %v727, 0.0
    %v733 = vld [vmem:[#allocation2 + $0x6] sm:$0x1]
    %v734 = vpack.c.bf16 %v732, %v732
    %v736 = vsel %vm154, %v734, 0
    %738 = vmatprep.subr.bf16.mxu0 0
    %739 = vmatpush1.bf16.msra.mxu0 0
    %740 = vmatprep.subr.bf16.mxu0 0
    %741 = vmatpush1.bf16.msra.mxu0 0
    %742 = vmatprep.subr.bf16.mxu0 0
    %743 = vmatpush1.bf16.msra.mxu0 0
    %744 = vmatprep.subr.bf16.mxu0 0
    %745 = vmatpush1.bf16.msra.mxu0 0
    %746 = vmatprep.subr.bf16.mxu0 0
    %747 = vmatpush1.bf16.msra.mxu0 0
    %748 = vmatprep.subr.bf16.mxu0 0
    %749 = vmatpush1.bf16.msra.mxu0 0
    %750 = vmatprep.subr.bf16.mxu0 0
    %751 = vmatpush1.bf16.msra.mxu0 %v161
    %752 = vmatprep.subr.bf16.mxu0 0
    %753 = vmatpush1.bf16.msra.mxu0 %v160
    %754 = vmatprep.subr.bf16.mxu0 0
    %755 = vmatpush2.bf16.msra.mxu0 0
    %756 = vmatprep.subr.bf16.mxu0 0
    %757 = vmatpush2.bf16.msra.mxu0 0
    %758 = vmatprep.subr.bf16.mxu0 0
    %759 = vmatpush2.bf16.msra.mxu0 0
    %760 = vmatprep.subr.bf16.mxu0 0
    %761 = vmatpush2.bf16.msra.mxu0 0
    %762 = vmatprep.subr.bf16.mxu0 0
    %763 = vmatpush2.bf16.msra.mxu0 0
    %764 = vmatprep.subr.bf16.mxu0 0
    %765 = vmatpush2.bf16.msra.mxu0 0
    %766 = vmatprep.subr.bf16.mxu0 0
    %767 = vmatpush2.bf16.msra.mxu0 0
    %768 = vmatprep.subr.bf16.mxu0 0
    %769 = vmatpush2.bf16.msra.mxu0 0
    %770 = vmatprep.mubr.bf16.mxu0 0
    %771 = vmatmul.mubr.bf16.gmra.mxu0 %v736
    %v772 = vpop.f32.mrf.mxu0
    %v773 = vadd.f32 0.0, %v772
    %v774 = vpop.f32.mrf.mxu0
    %v775 = vpop.f32.mrf.mxu0
    %v776 = vpop.f32.mrf.mxu0
    %777 = vdwg.mxu0
    %v778 = vadd.f32 %v733, %v773
    %v779 = vmax.f32 %v778, 0.0
    %v780 = vpack.c.bf16 %v779, %v779
    %v782 = vsel %vm154, %v780, 0
    %784 = vmatprep.subr.bf16.mxu0 0
    %785 = vmatpush1.bf16.msra.mxu0 0
    %786 = vmatprep.subr.bf16.mxu0 0
    %787 = vmatpush1.bf16.msra.mxu0 0
    %788 = vmatprep.subr.bf16.mxu0 0
    %789 = vmatpush1.bf16.msra.mxu0 0
    %790 = vmatprep.subr.bf16.mxu0 0
    %791 = vmatpush1.bf16.msra.mxu0 0
    %792 = vmatprep.subr.bf16.mxu0 0
    %793 = vmatpush1.bf16.msra.mxu0 0
    %794 = vmatprep.subr.bf16.mxu0 0
    %795 = vmatpush1.bf16.msra.mxu0 0
    %796 = vmatprep.subr.bf16.mxu0 0
    %797 = vmatpush1.bf16.msra.mxu0 %v167
    %798 = vmatprep.subr.bf16.mxu0 0
    %799 = vmatpush1.bf16.msra.mxu0 %v166
    %800 = vmatprep.subr.bf16.mxu0 0
    %801 = vmatpush2.bf16.msra.mxu0 0
    %802 = vmatprep.subr.bf16.mxu0 0
    %803 = vmatpush2.bf16.msra.mxu0 0
    %804 = vmatprep.subr.bf16.mxu0 0
    %805 = vmatpush2.bf16.msra.mxu0 0
    %806 = vmatprep.subr.bf16.mxu0 0
    %807 = vmatpush2.bf16.msra.mxu0 0
    %808 = vmatprep.subr.bf16.mxu0 0
    %809 = vmatpush2.bf16.msra.mxu0 0
    %810 = vmatprep.subr.bf16.mxu0 0
    %811 = vmatpush2.bf16.msra.mxu0 0
    %812 = vmatprep.subr.bf16.mxu0 0
    %813 = vmatpush2.bf16.msra.mxu0 0
    %814 = vmatprep.subr.bf16.mxu0 0
    %815 = vmatpush2.bf16.msra.mxu0 0
    %816 = vmatprep.mubr.bf16.mxu0 0
    %817 = vmatmul.mubr.bf16.gmra.mxu0 %v782
    %v818 = vpop.f32.mrf.mxu0
    %v819 = vadd.f32 0.0, %v818
    %v820 = vpop.f32.mrf.mxu0
    %v821 = vpop.f32.mrf.mxu0
    %v822 = vpop.f32.mrf.mxu0
    %823 = vdwg.mxu0
    %v824 = vmax.f32 %v819, 0.0
    %v825 = vpack.c.bf16 %v824, %v824
    %v827 = vsel %vm154, %v825, 0
    %829 = vmatprep.subr.bf16.mxu0 0
    %830 = vmatpush1.bf16.msra.mxu0 0
    %831 = vmatprep.subr.bf16.mxu0 0
    %832 = vmatpush1.bf16.msra.mxu0 0
    %833 = vmatprep.subr.bf16.mxu0 0
    %834 = vmatpush1.bf16.msra.mxu0 0
    %835 = vmatprep.subr.bf16.mxu0 0
    %836 = vmatpush1.bf16.msra.mxu0 0
    %837 = vmatprep.subr.bf16.mxu0 0
    %838 = vmatpush1.bf16.msra.mxu0 0
    %839 = vmatprep.subr.bf16.mxu0 0
    %840 = vmatpush1.bf16.msra.mxu0 0
    %841 = vmatprep.subr.bf16.mxu0 0
    %842 = vmatpush1.bf16.msra.mxu0 %v173
    %843 = vmatprep.subr.bf16.mxu0 0
    %844 = vmatpush1.bf16.msra.mxu0 %v172
    %845 = vmatprep.subr.bf16.mxu0 0
    %846 = vmatpush2.bf16.msra.mxu0 0
    %847 = vmatprep.subr.bf16.mxu0 0
    %848 = vmatpush2.bf16.msra.mxu0 0
    %849 = vmatprep.subr.bf16.mxu0 0
    %850 = vmatpush2.bf16.msra.mxu0 0
    %851 = vmatprep.subr.bf16.mxu0 0
    %852 = vmatpush2.bf16.msra.mxu0 0
    %853 = vmatprep.subr.bf16.mxu0 0
    %854 = vmatpush2.bf16.msra.mxu0 0
    %855 = vmatprep.subr.bf16.mxu0 0
    %856 = vmatpush2.bf16.msra.mxu0 0
    %857 = vmatprep.subr.bf16.mxu0 0
    %858 = vmatpush2.bf16.msra.mxu0 0
    %859 = vmatprep.subr.bf16.mxu0 0
    %860 = vmatpush2.bf16.msra.mxu0 0
    %861 = vmatprep.mubr.bf16.mxu0 0
    %862 = vmatmul.mubr.bf16.gmra.mxu0 %v827
    %v863 = vpop.f32.mrf.mxu0
    %v864 = vadd.f32 0.0, %v863
    %v865 = vpop.f32.mrf.mxu0
    %v866 = vpop.f32.mrf.mxu0
    %v867 = vpop.f32.mrf.mxu0
    %868 = vdwg.mxu0
    %v870 = vrot.slane %v864, 1
    %871 = vrot.lane.b32.xlu0 %v870, 32
    %v872 = vpop.permute.xlu0 %871
    %v874 = vadd.f32 %v151, %v872
    %v875 = vmax.f32 %v874, 0.0
    %v876 = vpack.c.bf16 %v875, %v875
    %v878 = vshrl.u32 %v876, 16
    %v880 = vrot.slane %v878, 3
    %881 = vrot.lane.b32.xlu0 %v880, 96
    %v882 = vpop.permute.xlu0 %881
    %v884 = vsel %vm154, %v882, 0
    %886 = vmatprep.subr.bf16.mxu0 0
    %887 = vmatpush1.bf16.msra.mxu0 0
    %888 = vmatprep.subr.bf16.mxu0 0
    %889 = vmatpush1.bf16.msra.mxu0 0
    %890 = vmatprep.subr.bf16.mxu0 0
    %891 = vmatpush1.bf16.msra.mxu0 0
    %892 = vmatprep.subr.bf16.mxu0 0
    %893 = vmatpush1.bf16.msra.mxu0 0
    %894 = vmatprep.subr.bf16.mxu0 0
    %895 = vmatpush1.bf16.msra.mxu0 0
    %896 = vmatprep.subr.bf16.mxu0 0
    %897 = vmatpush1.bf16.msra.mxu0 0
    %898 = vmatprep.subr.bf16.mxu0 0
    %899 = vmatpush1.bf16.msra.mxu0 %v179
    %900 = vmatprep.subr.bf16.mxu0 0
    %901 = vmatpush1.bf16.msra.mxu0 %v178
    %902 = vmatprep.subr.bf16.mxu0 0
    %903 = vmatpush2.bf16.msra.mxu0 0
    %904 = vmatprep.subr.bf16.mxu0 0
    %905 = vmatpush2.bf16.msra.mxu0 0
    %906 = vmatprep.subr.bf16.mxu0 0
    %907 = vmatpush2.bf16.msra.mxu0 0
    %908 = vmatprep.subr.bf16.mxu0 0
    %909 = vmatpush2.bf16.msra.mxu0 0
    %910 = vmatprep.subr.bf16.mxu0 0
    %911 = vmatpush2.bf16.msra.mxu0 0
    %912 = vmatprep.subr.bf16.mxu0 0
    %913 = vmatpush2.bf16.msra.mxu0 0
    %914 = vmatprep.subr.bf16.mxu0 0
    %915 = vmatpush2.bf16.msra.mxu0 0
    %916 = vmatprep.subr.bf16.mxu0 0
    %917 = vmatpush2.bf16.msra.mxu0 0
    %918 = vmatprep.mubr.bf16.mxu0 0
    %919 = vmatmul.mubr.bf16.gmra.mxu0 %v884
    %v920 = vpop.f32.mrf.mxu0
    %v921 = vadd.f32 0.0, %v920
    %v922 = vpop.f32.mrf.mxu0
    %v923 = vpop.f32.mrf.mxu0
    %v924 = vpop.f32.mrf.mxu0
    %925 = vdwg.mxu0
    %vm926 = vcmask 122880
    %927 = vst.msk [vmem:[#allocation9] sm:$0x1] %vm926, %v921
    // Predicated region
    $region46: #{tpu_custom_call.1} parent=1 // pred_check
      _
    $region47: #{tpu_custom_call.1} parent=1 // pred_check_branch
      %929 = sbr.rel (0) target = $region49
    $region48: #{tpu_custom_call.1} parent=1 // pred_region
      %s931 = ssub.s32 16, 16
      %932 = vsyncadd [#allocation5], %s931
      %s934 = sshll.u32 [#allocation9], 4
      %s935 = int_to_ptr.vmem [resolvable:$true] %s934
      %937 = dma.vmem_to_hbm [thread:$0]  %s935, 16, %s8, [#allocation5]
    $region49: #{tpu_custom_call.1} parent=1 // pred_fallthru
      _
    // Predicated region
    $region50: #{tpu_custom_call.1} parent=1 // pred_check
      _
    $region51: #{tpu_custom_call.1} parent=1 // pred_check_branch
      %939 = sbr.rel (0) target = $region53
    $region52: #{tpu_custom_call.1} parent=1 // pred_region
      %940 = dma.done [#allocation5], 16
    $region53: #{tpu_custom_call.1} parent=1 // pred_fallthru
      _
    %941 = vsyncpa [#allocation4], 1
    %942 = vsyncpa [#allocation7], 1
    %943 = vsyncpa [#allocation5], 1

</llo_original>
